<compile_context>
chip_gen: v7x
topology: tpu7x:2x2x1
jax: 0.10.0
libtpu: 0.0.40
codegen_flags: <defaults>
</compile_context>

<pallas_src>
import jax
import jax.numpy as jnp
from jax.experimental import pallas as pl
from jax.experimental.pallas import tpu as pltpu

F_IN = 50      # fc1 in
H1 = 50        # fc1 out
H2 = 100       # fc2 out
PAD = 128      # lane-padded width for the hidden dims
DEFAULT_TILE_B = 2048   # batch rows per grid step (multiple of 8)


def _round_up(n, m):
    return ((n + m - 1) // m) * m


def mlp_kernel(x_ref, w1_ref, b1_ref, w2_ref, b2_ref, w3_ref, b3_ref,
               alpha_ref, o_ref):
    x = x_ref[...]                                           # (tile_b, 50)

    # fc1 + ReLU.  w1 is (50, 128); padded output cols of w1/b1 are zero, and
    # Mosaic pads the K=50 contraction in-vreg, so numerics are unchanged.
    a1 = jnp.dot(x, w1_ref[...], preferred_element_type=jnp.float32) + b1_ref[...]
    h1 = jnp.maximum(a1, 0.0)

    # TODO(synk): Dropout(p=0.2) implemented as eval-mode identity (inference
    # semantics); training-mode masking would need pltpu.prng_seed +
    # pltpu.stateful_bernoulli and cannot match torch RNG anyway.
    dout = h1

    # fc2 + PReLU (single shared alpha from SMEM). Padded cols of w2/b2 are zero
    # -> a2/h2 padded cols are exactly zero.
    a2 = jnp.dot(dout, w2_ref[...], preferred_element_type=jnp.float32) + b2_ref[...]
    alpha = alpha_ref[0]
    h2 = jnp.where(a2 > 0.0, a2, alpha * a2)

    # Output layer has a single real column: VPU multiply against the padded w3
    # row + XLU lane-reduce (MXU pass avoided; padded lanes of w3/h2 are zero).
    a3 = jnp.sum(h2 * w3_ref[...], axis=-1, keepdims=True) + b3_ref[0]   # (tile_b, 1)

    # Numerically stable sigmoid via tanh (EUP slot), only on the real column.
    o_ref[...] = 0.5 * (jnp.tanh(0.5 * a3) + 1.0)


def prepare_params(params):
    """One-time param prep: transpose to (in, out) and zero-pad hidden dims."""
    f32 = jnp.float32
    w1 = jnp.zeros((F_IN, PAD), f32).at[:, :H1].set(params["w1"].T.astype(f32))
    b1 = jnp.zeros((1, PAD), f32).at[0, :H1].set(params["b1"].astype(f32))
    w2 = jnp.zeros((PAD, PAD), f32).at[:H1, :H2].set(params["w2"].T.astype(f32))
    b2 = jnp.zeros((1, PAD), f32).at[0, :H2].set(params["b2"].astype(f32))
    # Final layer (1 output): keep as a single zero-padded lane row; the kernel
    # reduces across lanes instead of running a third matmul.
    w3_row = jnp.zeros((1, PAD), f32).at[0, :H2].set(
        params["w3"].reshape(-1).astype(f32))
    b3 = params["b3"].reshape((1,)).astype(f32)
    alpha = params["prelu_alpha"].reshape((1,)).astype(f32)
    return {"w1": w1, "b1": b1, "w2": w2, "b2": b2,
            "w3_row": w3_row, "b3": b3, "alpha": alpha}


@jax.jit
def net_forward(x, prepared):
    """x: (B, 50) f32, prepared: output of prepare_params(). Returns (B, 1)."""
    B, F = x.shape
    assert F == F_IN
    x = x.astype(jnp.float32)

    # Pad batch only to a sublane multiple; partial last grid block is fine
    # (garbage rows only affect outputs that are sliced off / never written).
    b8 = _round_up(B, 8)
    tile_b = min(DEFAULT_TILE_B, b8)
    grid = pl.cdiv(b8, tile_b)

    x_pad = x if b8 == B else jnp.pad(x, ((0, b8 - B), (0, 0)))

    smem = pl.BlockSpec(memory_space=pltpu.MemorySpace.SMEM)
    const2d = lambda i: (0, 0)   # weights/biases: same block every step (resident)

    weight_bytes = 4 * (F_IN * PAD + PAD * PAD + 3 * PAD + 2)
    cost = pl.CostEstimate(
        flops=2 * b8 * (F_IN * PAD + PAD * PAD + PAD),
        transcendentals=b8,                                   # one tanh per row
        bytes_accessed=4 * (b8 * F_IN + b8) + weight_bytes,   # real data only
    )

    y_pad = pl.pallas_call(
        mlp_kernel,
        out_shape=jax.ShapeDtypeStruct((b8, 1), jnp.float32),
        grid=(grid,),
        in_specs=[
            pl.BlockSpec((tile_b, F_IN), lambda i: (i, 0)),   # x, unpadded 50 cols
            pl.BlockSpec((F_IN, PAD), const2d),               # w1 (resident)
            pl.BlockSpec((1, PAD), const2d),                  # b1
            pl.BlockSpec((PAD, PAD), const2d),                # w2
            pl.BlockSpec((1, PAD), const2d),                  # b2
            pl.BlockSpec((1, PAD), const2d),                  # w3 row
            smem,                                             # b3 scalar
            smem,                                             # alpha scalar
        ],
        out_specs=pl.BlockSpec((tile_b, 1), lambda i: (i, 0)),
        compiler_params=pltpu.CompilerParams(
            # TODO(synk): on v7x, CORE_PARALLEL (or pl.core_map over a TC mesh)
            # would shard the batch axis across both TensorCores; "parallel" is
            # the portable choice that compiles on every generation.
            dimension_semantics=("parallel",)),
        cost_estimate=cost,
    )(x_pad, prepared["w1"], prepared["b1"], prepared["w2"], prepared["b2"],
      prepared["w3_row"], prepared["b3"], prepared["alpha"])

    return y_pad[:B, :]


def init_params(key):
    """Deterministic init mimicking nn.Linear default (uniform +/- 1/sqrt(fan_in))."""
    ks = jax.random.split(key, 6)

    def linear(kw, kb, fan_in, fan_out):
        bound = 1.0 / jnp.sqrt(fan_in)
        w = jax.random.uniform(kw, (fan_out, fan_in), jnp.float32, -bound, bound)
        b = jax.random.uniform(kb, (fan_out,), jnp.float32, -bound, bound)
        return w, b

    w1, b1 = linear(ks[0], ks[1], 50, 50)
    w2, b2 = linear(ks[2], ks[3], 50, 100)
    w3, b3 = linear(ks[4], ks[5], 100, 1)
    return {
        "w1": w1, "b1": b1,
        "w2": w2, "b2": b2,
        "w3": w3, "b3": b3,
        "prelu_alpha": jnp.array([0.25], jnp.float32),  # PyTorch PReLU default
    }


def reference_forward(x, params):
    """Plain-JAX reference for sanity checking (torch layout weights)."""
    a1 = x @ params["w1"].T + params["b1"]
    h1 = jnp.maximum(a1, 0.0)
    a2 = h1 @ params["w2"].T + params["b2"]
    alpha = params["prelu_alpha"][0]
    h2 = jnp.where(a2 > 0.0, a2, alpha * a2)
    a3 = h2 @ params["w3"].T + params["b3"]
    return jax.nn.sigmoid(a3)


if __name__ == "__main__":
    key = jax.random.PRNGKey(0)
    k_x, k_p = jax.random.split(key)

    params = init_params(k_p)
    prepared = prepare_params(params)   # one-time transpose + pad

    # Small-batch check (single grid step, batch padded 4 -> 8 sublanes).
    B = 4
    x = jax.random.normal(k_x, (B, F_IN), jnp.float32)
    y = jax.block_until_ready(net_forward(x, prepared))
    y_ref = reference_forward(x, params)
    assert y.shape == (B, 1)
    assert jnp.allclose(y, y_ref, atol=1e-5, rtol=1e-5)

    # Larger-batch check: multiple grid steps + partial last block (2504 rows,
    # tile_b=2048 -> grid=2, second block partially filled).
    B2 = 2500
    x2 = jax.random.normal(jax.random.PRNGKey(1), (B2, F_IN), jnp.float32)
    y2 = jax.block_until_ready(net_forward(x2, prepared))
    y2_ref = reference_forward(x2, params)
    assert y2.shape == (B2, 1)
    assert jnp.allclose(y2, y2_ref, atol=1e-5, rtol=1e-5)

    print("KERNEL_OK")
</pallas_src>

<mosaic_0001>
module attributes {stable_mosaic.version = 11 : i64} {
  func.func @mlp_kernel(%arg0: i32, %arg1: memref<8x50xf32, #tpu.memory_space<vmem>>, %arg2: memref<50x128xf32, #tpu.memory_space<vmem>>, %arg3: memref<1x128xf32, #tpu.memory_space<vmem>>, %arg4: memref<128x128xf32, #tpu.memory_space<vmem>>, %arg5: memref<1x128xf32, #tpu.memory_space<vmem>>, %arg6: memref<1x128xf32, #tpu.memory_space<vmem>>, %arg7: memref<1xf32, #tpu.memory_space<smem>>, %arg8: memref<1xf32, #tpu.memory_space<smem>>, %arg9: memref<8x1xf32, #tpu.memory_space<vmem>>) attributes {dimension_semantics = [#tpu.dimension_semantics<parallel>], iteration_bounds = array<i64: 1>, scalar_prefetch = 0 : i64, scratch_operands = 0 : i64, tpu.core_type = #tpu.core_type<tc>, window_params = [{transform_indices = @transform_0, window_bounds = array<i64: 8, 50>}, {pipeline_mode = #tpu.pipeline_mode<synchronous>, transform_indices = @transform_1, window_bounds = array<i64: 50, 128>}, {pipeline_mode = #tpu.pipeline_mode<synchronous>, transform_indices = @transform_2, window_bounds = array<i64: 1, 128>}, {pipeline_mode = #tpu.pipeline_mode<synchronous>, transform_indices = @transform_3, window_bounds = array<i64: 128, 128>}, {pipeline_mode = #tpu.pipeline_mode<synchronous>, transform_indices = @transform_4, window_bounds = array<i64: 1, 128>}, {pipeline_mode = #tpu.pipeline_mode<synchronous>, transform_indices = @transform_5, window_bounds = array<i64: 1, 128>}, {transform_indices = @transform_6, window_bounds = array<i64: 1>}, {transform_indices = @transform_7, window_bounds = array<i64: 1>}, {transform_indices = @transform_8, window_bounds = array<i64: 8, 1>}]} {
    %c0 = arith.constant 0 : index
    %c0_0 = arith.constant 0 : index
    %0 = vector.load %arg1[%c0, %c0_0] : memref<8x50xf32, #tpu.memory_space<vmem>>, vector<8x50xf32>
    %c0_1 = arith.constant 0 : index
    %c0_2 = arith.constant 0 : index
    %1 = vector.load %arg2[%c0_1, %c0_2] : memref<50x128xf32, #tpu.memory_space<vmem>>, vector<50x128xf32>
    %cst = arith.constant dense<0.000000e+00> : vector<8x128xf32>
    %2 = tpu.matmul %0, %1, %cst {dimension_numbers = #tpu.dot_dimension_numbers<[1], [0], [0], [1], [0, 0, 1, 1], [], []>} : vector<8x50xf32>, vector<50x128xf32>, vector<8x128xf32> -> vector<8x128xf32>
    %c0_3 = arith.constant 0 : index
    %c0_4 = arith.constant 0 : index
    %3 = vector.load %arg3[%c0_3, %c0_4] : memref<1x128xf32, #tpu.memory_space<vmem>>, vector<1x128xf32>
    %4 = vector.broadcast %3 : vector<1x128xf32> to vector<8x128xf32>
    %5 = arith.addf %2, %4 : vector<8x128xf32>
    %cst_5 = arith.constant 0.000000e+00 : f32
    %6 = vector.broadcast %cst_5 : f32 to vector<8x128xf32>
    %7 = arith.maximumf %5, %6 : vector<8x128xf32>
    %c0_6 = arith.constant 0 : index
    %c0_7 = arith.constant 0 : index
    %8 = vector.load %arg4[%c0_6, %c0_7] : memref<128x128xf32, #tpu.memory_space<vmem>>, vector<128x128xf32>
    %cst_8 = arith.constant dense<0.000000e+00> : vector<8x128xf32>
    %9 = tpu.matmul %7, %8, %cst_8 {dimension_numbers = #tpu.dot_dimension_numbers<[1], [0], [0], [1], [0, 0, 1, 1], [], []>} : vector<8x128xf32>, vector<128x128xf32>, vector<8x128xf32> -> vector<8x128xf32>
    %c0_9 = arith.constant 0 : index
    %c0_10 = arith.constant 0 : index
    %10 = vector.load %arg5[%c0_9, %c0_10] : memref<1x128xf32, #tpu.memory_space<vmem>>, vector<1x128xf32>
    %11 = vector.broadcast %10 : vector<1x128xf32> to vector<8x128xf32>
    %12 = arith.addf %9, %11 : vector<8x128xf32>
    %c0_11 = arith.constant 0 : index
    %13 = memref.load %arg8[%c0_11] : memref<1xf32, #tpu.memory_space<smem>>
    %cst_12 = arith.constant 0.000000e+00 : f32
    %14 = vector.broadcast %cst_12 : f32 to vector<8x128xf32>
    %15 = arith.cmpf ogt, %12, %14 : vector<8x128xf32>
    %16 = vector.broadcast %13 : f32 to vector<8x128xf32>
    %17 = arith.mulf %16, %12 : vector<8x128xf32>
    %18 = arith.select %15, %12, %17 : vector<8x128xi1>, vector<8x128xf32>
    %c0_13 = arith.constant 0 : index
    %c0_14 = arith.constant 0 : index
    %19 = vector.load %arg6[%c0_13, %c0_14] : memref<1x128xf32, #tpu.memory_space<vmem>>, vector<1x128xf32>
    %20 = vector.broadcast %19 : vector<1x128xf32> to vector<8x128xf32>
    %21 = arith.mulf %18, %20 : vector<8x128xf32>
    %cst_15 = arith.constant dense<0.000000e+00> : vector<8xf32>
    %22 = vector.multi_reduction <add>, %21, %cst_15 [1] : vector<8x128xf32> to vector<8xf32>
    %23 = vector.shape_cast %22 : vector<8xf32> to vector<8x1xf32>
    %c0_16 = arith.constant 0 : index
    %24 = memref.load %arg7[%c0_16] : memref<1xf32, #tpu.memory_space<smem>>
    %25 = vector.broadcast %24 : f32 to vector<8x1xf32>
    %26 = arith.addf %23, %25 : vector<8x1xf32>
    %cst_17 = arith.constant 5.000000e-01 : f32
    %27 = vector.broadcast %cst_17 : f32 to vector<8x1xf32>
    %28 = arith.mulf %27, %26 : vector<8x1xf32>
    %29 = math.tanh %28 : vector<8x1xf32>
    %cst_18 = arith.constant 1.000000e+00 : f32
    %30 = vector.broadcast %cst_18 : f32 to vector<8x1xf32>
    %31 = arith.addf %29, %30 : vector<8x1xf32>
    %cst_19 = arith.constant 5.000000e-01 : f32
    %32 = vector.broadcast %cst_19 : f32 to vector<8x1xf32>
    %33 = arith.mulf %32, %31 : vector<8x1xf32>
    %c0_20 = arith.constant 0 : index
    %c0_21 = arith.constant 0 : index
    %34 = vector.load %arg9[%c0_20, %c0_21] : memref<8x1xf32, #tpu.memory_space<vmem>>, vector<8x1xf32>
    tpu.vector_store %arg9[%c0_20, %c0_21], %33 {strides = array<i32>} : memref<8x1xf32, #tpu.memory_space<vmem>>, vector<8x1xf32>,
    return
  }
  func.func @transform_0(%arg0: i32) -> (i32, i32) {
    %c0_i32 = arith.constant 0 : i32
    %c0_i32_0 = arith.constant 0 : i32
    return %arg0, %c0_i32 : i32, i32
  }
  func.func @transform_1(%arg0: i32) -> (i32, i32) {
    %c0_i32 = arith.constant 0 : i32
    %c0_i32_0 = arith.constant 0 : i32
    %c0_i32_1 = arith.constant 0 : i32
    return %c0_i32, %c0_i32_0 : i32, i32
  }
  func.func @transform_2(%arg0: i32) -> (i32, i32) {
    %c0_i32 = arith.constant 0 : i32
    %c0_i32_0 = arith.constant 0 : i32
    %c0_i32_1 = arith.constant 0 : i32
    return %c0_i32, %c0_i32_0 : i32, i32
  }
  func.func @transform_3(%arg0: i32) -> (i32, i32) {
    %c0_i32 = arith.constant 0 : i32
    %c0_i32_0 = arith.constant 0 : i32
    %c0_i32_1 = arith.constant 0 : i32
    return %c0_i32, %c0_i32_0 : i32, i32
  }
  func.func @transform_4(%arg0: i32) -> (i32, i32) {
    %c0_i32 = arith.constant 0 : i32
    %c0_i32_0 = arith.constant 0 : i32
    %c0_i32_1 = arith.constant 0 : i32
    return %c0_i32, %c0_i32_0 : i32, i32
  }
  func.func @transform_5(%arg0: i32) -> (i32, i32) {
    %c0_i32 = arith.constant 0 : i32
    %c0_i32_0 = arith.constant 0 : i32
    %c0_i32_1 = arith.constant 0 : i32
    return %c0_i32, %c0_i32_0 : i32, i32
  }
  func.func @transform_6(%arg0: i32) -> i32 {
    %c0_i32 = arith.constant 0 : i32
    %c0_i32_0 = arith.constant 0 : i32
    return %c0_i32 : i32
  }
  func.func @transform_7(%arg0: i32) -> i32 {
    %c0_i32 = arith.constant 0 : i32
    %c0_i32_0 = arith.constant 0 : i32
    return %c0_i32 : i32
  }
  func.func @transform_8(%arg0: i32) -> (i32, i32) {
    %c0_i32 = arith.constant 0 : i32
    %c0_i32_0 = arith.constant 0 : i32
    return %arg0, %c0_i32 : i32, i32
  }
}

</mosaic_0001>

<llo_original>
// kernel: net_forward.1
$region0: #{net_forward.1}
  #allocation0 [shape = 'u32[]', space=smem, size = 0x4, offset = 0x4, fixed_abs, tag = 'smem constant byte address 0x4 - core index']
  #allocation1 [shape = 'u32[144,128]{1,0:T(1,128)}', space=vmem, size = 0x12000, scoped, tag = 'internal scratch']
  #allocation2 [shape = 'f32[1]{0:T(128)S(6)}', space=smem, size = 0x200, scoped, tag = 'scoped memory for net_forward.1']
  #allocation3 [shape = 'f32[1]{0:T(128)S(6)}', space=smem, size = 0x200, scoped, tag = 'scoped memory for net_forward.1']
  %s0 = inlined_call_operand.vmem [shape: f32[8,50], index: 0, kind: input, shape index: {}]
  %s1 = inlined_call_operand.hbm [shape: f32[50,128], index: 1, kind: input, shape index: {}]
  %s2 = inlined_call_operand.vmem [shape: f32[1,128], index: 2, kind: input, shape index: {}]
  %s3 = inlined_call_operand.hbm [shape: f32[128,128], index: 3, kind: input, shape index: {}]
  %s4 = inlined_call_operand.vmem [shape: f32[1,128], index: 4, kind: input, shape index: {}]
  %s5 = inlined_call_operand.vmem [shape: f32[1,128], index: 5, kind: input, shape index: {}]
  %s6 = inlined_call_operand.<no memory space> [shape: f32[1], index: 6, kind: input, shape index: {}]
  %s7 = inlined_call_operand.<no memory space> [shape: f32[1], index: 7, kind: input, shape index: {}]
  %s8 = inlined_call_operand.vmem [shape: f32[8,1], index: 8, kind: output, shape index: {}]
  %s9 = sld [smem:[#allocation0]]
  $region50: #{net_forward.1} parent=0
    _
  %s11 = ssub.s32 1, %s9
  %s12 = scalar_select 0, %s11, %s9
  %13 = sst [smem:[#allocation2]] %s6
  %14 = sst [smem:[#allocation3]] %s7
  $region1: #{net_forward.1} parent=0
    #allocation4 [shape = 'u8[28672]{0}', space=vmem, size = 0x7000, scoped, tag = 'input window, operand 1, single buffered']
    #allocation5 [shape = 's32[1]{0}', space=sflag, size = 0x4, scoped, tag = 'scoped memory for net_forward.1']
    #allocation6 [shape = 'u8[65536]{0}', space=vmem, size = 0x10000, scoped, tag = 'input window, operand 3, single buffered']
    #allocation7 [shape = 's32[1]{0}', space=sflag, size = 0x4, scoped, tag = 'scoped memory for net_forward.1']
    %15 = vsyncpa [#allocation5], 0
    %16 = vsyncpa [#allocation7], 0
    // Predicated region
    $region2: #{net_forward.1} parent=1 // pred_check
      _
    $region3: #{net_forward.1} parent=1 // pred_check_branch
      %18 = sbr.rel (0) target = $region5
    $region4: #{net_forward.1} parent=1 // pred_region
      _
    $region5: #{net_forward.1} parent=1 // pred_fallthru
      _
    // Predicated region
    $region6: #{net_forward.1} parent=1 // pred_check
      _
    $region7: #{net_forward.1} parent=1 // pred_check_branch
      %20 = sbr.rel (0) target = $region9
    $region8: #{net_forward.1} parent=1 // pred_region
      %s22 = ssub.s32 896, 896
      %23 = vsyncadd [#allocation5], %s22
      %s24 = sshll.u32 [#allocation4], 4
      %s25 = int_to_ptr.vmem [resolvable:$true] %s24
      %30 = dma.hbm_to_vmem [thread:$0]  %s1, 896, %s25, [#allocation5], 128, 128, 8
    $region9: #{net_forward.1} parent=1 // pred_fallthru
      _
    // Predicated region
    $region10: #{net_forward.1} parent=1 // pred_check
      _
    $region11: #{net_forward.1} parent=1 // pred_check_branch
      %32 = sbr.rel (0) target = $region13
    $region12: #{net_forward.1} parent=1 // pred_region
      _
    $region13: #{net_forward.1} parent=1 // pred_fallthru
      _
    // Predicated region
    $region14: #{net_forward.1} parent=1 // pred_check
      _
    $region15: #{net_forward.1} parent=1 // pred_check_branch
      %34 = sbr.rel (0) target = $region17
    $region16: #{net_forward.1} parent=1 // pred_region
      %s36 = ssub.s32 2048, 2048
      %37 = vsyncadd [#allocation7], %s36
      %s38 = sshll.u32 [#allocation6], 4
      %s39 = int_to_ptr.vmem [resolvable:$true] %s38
      %44 = dma.hbm_to_vmem [thread:$0]  %s3, 2048, %s39, [#allocation7], 128, 128, 8
    $region17: #{net_forward.1} parent=1 // pred_fallthru
      _
    // Predicated region
    $region18: #{net_forward.1} parent=1 // pred_check
      _
    $region19: #{net_forward.1} parent=1 // pred_check_branch
      %46 = sbr.rel (0) target = $region21
    $region20: #{net_forward.1} parent=1 // pred_region
      _
    $region21: #{net_forward.1} parent=1 // pred_fallthru
      _
    // Predicated region
    $region22: #{net_forward.1} parent=1 // pred_check
      _
    $region23: #{net_forward.1} parent=1 // pred_check_branch
      %48 = sbr.rel (0) target = $region25
    $region24: #{net_forward.1} parent=1 // pred_region
      _
    $region25: #{net_forward.1} parent=1 // pred_fallthru
      _
    // Predicated region
    $region26: #{net_forward.1} parent=1 // pred_check
      _
    $region27: #{net_forward.1} parent=1 // pred_check_branch
      %50 = sbr.rel (0) target = $region29
    $region28: #{net_forward.1} parent=1 // pred_region
      _
    $region29: #{net_forward.1} parent=1 // pred_fallthru
      _
    // Predicated region
    $region30: #{net_forward.1} parent=1 // pred_check
      _
    $region31: #{net_forward.1} parent=1 // pred_check_branch
      %52 = sbr.rel (0) target = $region33
    $region32: #{net_forward.1} parent=1 // pred_region
      _
    $region33: #{net_forward.1} parent=1 // pred_fallthru
      _
    // Predicated region
    $region34: #{net_forward.1} parent=1 // pred_check
      _
    $region35: #{net_forward.1} parent=1 // pred_check_branch
      %54 = sbr.rel (0) target = $region37
    $region36: #{net_forward.1} parent=1 // pred_region
      %55 = dma.done [#allocation5], 896
    $region37: #{net_forward.1} parent=1 // pred_fallthru
      _
    // Predicated region
    $region38: #{net_forward.1} parent=1 // pred_check
      _
    $region39: #{net_forward.1} parent=1 // pred_check_branch
      %57 = sbr.rel (0) target = $region41
    $region40: #{net_forward.1} parent=1 // pred_region
      %58 = dma.done [#allocation7], 2048
    $region41: #{net_forward.1} parent=1 // pred_fallthru
      _
    %v59 = vld [vmem:[%s0] sm:$0xff]
    %v60 = vld [vmem:[#allocation4] sm:$0xff]
    %v61 = vld [vmem:[#allocation4 + $0x8] sm:$0xff]
    %v62 = vld [vmem:[#allocation4 + $0x10] sm:$0xff]
    %v63 = vld [vmem:[#allocation4 + $0x18] sm:$0xff]
    %v64 = vld [vmem:[#allocation4 + $0x20] sm:$0xff]
    %v65 = vld [vmem:[#allocation4 + $0x28] sm:$0xff]
    %v66 = vld [vmem:[#allocation4 + $0x30] sm:$0x3]
    %v67 = vld [vmem:[%s2] sm:$0x1]
    %v69 = vlaneseq
    %v70 = vshrl.u32 %v69, 7
    %v71 = vsub.s32 0, %v70
    %v72 = vrot.slane %v67, %v71
    %vm74 = vcmask 408576
    %v76 = vsel %vm74, %v59, 0
    %vm78 = vcmask 1041408
    %v80 = vsel %vm78, %v66, 0
    %82 = vmatprep.subr.mxu0 0.0
    %83 = vmatpush1.msra.mxu0 %v60
    %84 = vmatprep.subr.mxu0 0.0
    %85 = vmatpush1.msra.mxu0 %v61
    %86 = vmatprep.subr.mxu0 0.0
    %87 = vmatpush1.msra.mxu0 %v62
    %88 = vmatprep.subr.mxu0 0.0
    %89 = vmatpush1.msra.mxu0 %v63
    %90 = vmatprep.subr.mxu0 0.0
    %91 = vmatpush1.msra.mxu0 %v64
    %92 = vmatprep.subr.mxu0 0.0
    %93 = vmatpush1.msra.mxu0 %v65
    %94 = vmatprep.subr.mxu0 0.0
    %95 = vmatpush1.msra.mxu0 %v80
    %96 = vmatprep.subr.mxu0 0.0
    %97 = vmatpush1.msra.mxu0 0.0
    %98 = vmatprep.subr.mxu0 0.0
    %99 = vmatpush1.msra.mxu0 0.0
    %100 = vmatprep.subr.mxu0 0.0
    %101 = vmatpush1.msra.mxu0 0.0
    %102 = vmatprep.subr.mxu0 0.0
    %103 = vmatpush1.msra.mxu0 0.0
    %104 = vmatprep.subr.mxu0 0.0
    %105 = vmatpush1.msra.mxu0 0.0
    %106 = vmatprep.subr.mxu0 0.0
    %107 = vmatpush1.msra.mxu0 0.0
    %108 = vmatprep.subr.mxu0 0.0
    %109 = vmatpush1.msra.mxu0 0.0
    %110 = vmatprep.subr.mxu0 0.0
    %111 = vmatpush1.msra.mxu0 0.0
    %112 = vmatprep.subr.mxu0 0.0
    %113 = vmatpush1.msra.mxu0 0.0
    %114 = vmatprep.subr.mxu0 0.0
    %115 = vmatpush1.msra.mxu0 0.0
    %116 = vmatprep.subr.mxu0 0.0
    %117 = vmatpush1.msra.mxu0 0.0
    %118 = vmatprep.subr.mxu0 0.0
    %119 = vmatpush1.msra.mxu0 0.0
    %120 = vmatprep.subr.mxu0 0.0
    %121 = vmatpush1.msra.mxu0 0.0
    %122 = vmatprep.subr.mxu0 0.0
    %123 = vmatpush1.msra.mxu0 0.0
    %124 = vmatprep.subr.mxu0 0.0
    %125 = vmatpush1.msra.mxu0 0.0
    %126 = vmatprep.subr.mxu0 0.0
    %127 = vmatpush1.msra.mxu0 0.0
    %128 = vmatprep.subr.mxu0 0.0
    %129 = vmatpush1.msra.mxu0 0.0
    %130 = vmatprep.subr.mxu0 0.0
    %131 = vmatpush1.msra.mxu0 0.0
    %132 = vmatprep.subr.mxu0 0.0
    %133 = vmatpush1.msra.mxu0 0.0
    %134 = vmatprep.subr.mxu0 0.0
    %135 = vmatpush1.msra.mxu0 0.0
    %136 = vmatprep.subr.mxu0 0.0
    %137 = vmatpush1.msra.mxu0 0.0
    %138 = vmatprep.subr.mxu0 0.0
    %139 = vmatpush1.msra.mxu0 0.0
    %140 = vmatprep.subr.mxu0 0.0
    %141 = vmatpush1.msra.mxu0 0.0
    %142 = vmatprep.subr.mxu0 0.0
    %143 = vmatpush1.msra.mxu0 0.0
    %144 = vmatprep.subr.mxu0 0.0
    %145 = vmatpush1.msra.mxu0 0.0
    %146 = vmatprep.mubr.f32.mxu0 0.0
    %147 = vmatmul.mubr.f32.gmra.mrb[0].mxu0 %v76
    %v148 = vpop.f32.mrb[0].mxu0
    %v149 = vadd.f32 %v72, %v148
    %v150 = vpop.f32.mrb[0].mxu0
    %151 = vdwg.mxu0
    %v152 = vmax.f32 %v149, 0.0
    %v153 = vld [vmem:[#allocation6] sm:$0xff]
    %v154 = vld [vmem:[#allocation6 + $0x8] sm:$0xff]
    %v155 = vld [vmem:[#allocation6 + $0x10] sm:$0xff]
    %v156 = vld [vmem:[#allocation6 + $0x18] sm:$0xff]
    %v157 = vld [vmem:[#allocation6 + $0x20] sm:$0xff]
    %v158 = vld [vmem:[#allocation6 + $0x28] sm:$0xff]
    %v159 = vld [vmem:[#allocation6 + $0x30] sm:$0xff]
    %v160 = vld [vmem:[#allocation6 + $0x38] sm:$0xff]
    %v161 = vld [vmem:[#allocation6 + $0x40] sm:$0xff]
    %v162 = vld [vmem:[#allocation6 + $0x48] sm:$0xff]
    %v163 = vld [vmem:[#allocation6 + $0x50] sm:$0xff]
    %v164 = vld [vmem:[#allocation6 + $0x58] sm:$0xff]
    %v165 = vld [vmem:[#allocation6 + $0x60] sm:$0xff]
    %v166 = vld [vmem:[#allocation6 + $0x68] sm:$0xff]
    %v167 = vld [vmem:[#allocation6 + $0x70] sm:$0xff]
    %v168 = vld [vmem:[#allocation6 + $0x78] sm:$0xff]
    %v169 = vld [vmem:[%s4] sm:$0x1]
    %v171 = vlaneseq
    %v172 = vshrl.u32 %v171, 7
    %v173 = vsub.s32 0, %v172
    %v174 = vrot.slane %v169, %v173
    %176 = vmatprep.subr.mxu0 0.0
    %177 = vmatpush1.msra.mxu0 %v153
    %178 = vmatprep.subr.mxu0 0.0
    %179 = vmatpush1.msra.mxu0 %v154
    %180 = vmatprep.subr.mxu0 0.0
    %181 = vmatpush1.msra.mxu0 %v155
    %182 = vmatprep.subr.mxu0 0.0
    %183 = vmatpush1.msra.mxu0 %v156
    %184 = vmatprep.subr.mxu0 0.0
    %185 = vmatpush1.msra.mxu0 %v157
    %186 = vmatprep.subr.mxu0 0.0
    %187 = vmatpush1.msra.mxu0 %v158
    %188 = vmatprep.subr.mxu0 0.0
    %189 = vmatpush1.msra.mxu0 %v159
    %190 = vmatprep.subr.mxu0 0.0
    %191 = vmatpush1.msra.mxu0 %v160
    %192 = vmatprep.subr.mxu0 0.0
    %193 = vmatpush1.msra.mxu0 %v161
    %194 = vmatprep.subr.mxu0 0.0
    %195 = vmatpush1.msra.mxu0 %v162
    %196 = vmatprep.subr.mxu0 0.0
    %197 = vmatpush1.msra.mxu0 %v163
    %198 = vmatprep.subr.mxu0 0.0
    %199 = vmatpush1.msra.mxu0 %v164
    %200 = vmatprep.subr.mxu0 0.0
    %201 = vmatpush1.msra.mxu0 %v165
    %202 = vmatprep.subr.mxu0 0.0
    %203 = vmatpush1.msra.mxu0 %v166
    %204 = vmatprep.subr.mxu0 0.0
    %205 = vmatpush1.msra.mxu0 %v167
    %206 = vmatprep.subr.mxu0 0.0
    %207 = vmatpush1.msra.mxu0 %v168
    %208 = vmatprep.subr.mxu0 0.0
    %209 = vmatpush1.msra.mxu0 0.0
    %210 = vmatprep.subr.mxu0 0.0
    %211 = vmatpush1.msra.mxu0 0.0
    %212 = vmatprep.subr.mxu0 0.0
    %213 = vmatpush1.msra.mxu0 0.0
    %214 = vmatprep.subr.mxu0 0.0
    %215 = vmatpush1.msra.mxu0 0.0
    %216 = vmatprep.subr.mxu0 0.0
    %217 = vmatpush1.msra.mxu0 0.0
    %218 = vmatprep.subr.mxu0 0.0
    %219 = vmatpush1.msra.mxu0 0.0
    %220 = vmatprep.subr.mxu0 0.0
    %221 = vmatpush1.msra.mxu0 0.0
    %222 = vmatprep.subr.mxu0 0.0
    %223 = vmatpush1.msra.mxu0 0.0
    %224 = vmatprep.subr.mxu0 0.0
    %225 = vmatpush1.msra.mxu0 0.0
    %226 = vmatprep.subr.mxu0 0.0
    %227 = vmatpush1.msra.mxu0 0.0
    %228 = vmatprep.subr.mxu0 0.0
    %229 = vmatpush1.msra.mxu0 0.0
    %230 = vmatprep.subr.mxu0 0.0
    %231 = vmatpush1.msra.mxu0 0.0
    %232 = vmatprep.subr.mxu0 0.0
    %233 = vmatpush1.msra.mxu0 0.0
    %234 = vmatprep.subr.mxu0 0.0
    %235 = vmatpush1.msra.mxu0 0.0
    %236 = vmatprep.subr.mxu0 0.0
    %237 = vmatpush1.msra.mxu0 0.0
    %238 = vmatprep.subr.mxu0 0.0
    %239 = vmatpush1.msra.mxu0 0.0
    %240 = vmatprep.mubr.f32.mxu0 0.0
    %241 = vmatmul.mubr.f32.gmra.mrb[0].mxu0 %v152
    %v242 = vpop.f32.mrb[0].mxu0
    %v243 = vadd.f32 %v174, %v242
    %v244 = vpop.f32.mrb[0].mxu0
    %245 = vdwg.mxu0
    %s246 = sld [smem:[#allocation3]]
    %vm247 = vcmp.gt.f32.partialorder %v243, 0.0
    %v248 = vstv %s246
    %v249 = vmul.f32 %v248, %v243
    %v250 = vsel %vm247, %v243, %v249
    %v251 = vld [vmem:[%s5] sm:$0x1]
    %v253 = vlaneseq
    %v254 = vshrl.u32 %v253, 7
    %v255 = vsub.s32 0, %v254
    %v256 = vrot.slane %v251, %v255
    %v258 = vmul.f32 %v250, %v256
    %259 = vadd.xlane.f32.xlu0 %v258
    %v260 = vpop.xlane.xlu0 %259
    %s261 = sld [smem:[#allocation2]]
    %v262 = vstv %s261
    %v263 = vadd.f32 %v260, %v262
    %v264 = vmul.f32 %v263, 0.5
    %v265 = vtanh.pop %v264
    %v266 = vadd.f32 %v265, 1.0
    %v267 = vmul.f32 %v266, 0.5
    %vm268 = vcmask 7168
    %269 = vst.msk [vmem:[%s8] sm:$0xff] %vm268, %v267
    // Predicated region
    $region42: #{net_forward.1} parent=1 // pred_check
      _
    $region43: #{net_forward.1} parent=1 // pred_check_branch
      %271 = sbr.rel (0) target = $region45
    $region44: #{net_forward.1} parent=1 // pred_region
      _
    $region45: #{net_forward.1} parent=1 // pred_fallthru
      _
    // Predicated region
    $region46: #{net_forward.1} parent=1 // pred_check
      _
    $region47: #{net_forward.1} parent=1 // pred_check_branch
      %273 = sbr.rel (0) target = $region49
    $region48: #{net_forward.1} parent=1 // pred_region
      _
    $region49: #{net_forward.1} parent=1 // pred_fallthru
      _
    %274 = vsyncpa [#allocation5], 1
    %275 = vsyncpa [#allocation7], 1

</llo_original>
